<compile_context>
chip_gen: v7x
topology: tpu7x:2x2x1
jax: 0.10.0
libtpu: 0.0.40
codegen_flags: <defaults>
</compile_context>

<pallas_src>
import jax
import jax.numpy as jnp
from jax.experimental import pallas as pl
from jax.experimental.pallas import tpu as pltpu  # noqa: F401  (TPU backend)

NUM_CODES = 2645
CODE_DIM = 4
_FLAT = NUM_CODES * CODE_DIM          # 10580
_ROWS = 23                            # 23 * 460 == 10580
_COLS = 460


def _code_forward_kernel(code_ref, o_ref):
    # Single full-extent block: one pass of vld/vst over ~12 packed vregs.
    o_ref[...] = code_ref[...]


def code_forward(code_param, x=None, *, use_kernel=False):
    """Mirrors Code.forward(x): `x` is ignored, the codebook is returned.

    Default (`use_kernel=False`) is a zero-cost pure-JAX identity, as the
    forward is just returning a stored parameter.  `use_kernel=True` routes
    through the Pallas identity kernel.
    """
    del x  # unused by the reference forward

    if not use_kernel:
        # Recommended default: no kernel launch, XLA aliases the parameter.
        return code_param

    # Sublane+lane dense packing: contiguous row-major reshape, free in XLA.
    packed = code_param.reshape(_ROWS, _COLS)

    out = pl.pallas_call(
        _code_forward_kernel,
        out_shape=jax.ShapeDtypeStruct((_ROWS, _COLS), code_param.dtype),
        in_specs=[pl.BlockSpec((_ROWS, _COLS), lambda: (0, 0))],
        out_specs=pl.BlockSpec((_ROWS, _COLS), lambda: (0, 0)),
        cost_estimate=pl.CostEstimate(
            flops=0,
            transcendentals=0,
            bytes_accessed=2 * _FLAT * 4,
        ),
    )(packed)

    return out.reshape(NUM_CODES, CODE_DIM)


if __name__ == "__main__":
    key = jax.random.PRNGKey(0)

    # Parameter initialized exactly as in the PyTorch module: zeros([2645, 4]).
    code_param = jnp.zeros((NUM_CODES, CODE_DIM), dtype=jnp.float32)

    # Example input (ignored by the forward, as in the reference module).
    x = jax.random.normal(key, (2, 4), dtype=jnp.float32)

    # Run the Pallas kernel path once.
    out_kernel = code_forward(code_param, x, use_kernel=True)
    out_kernel = jax.block_until_ready(out_kernel)

    # Default (pure-JAX identity) path.
    out_fast = jax.block_until_ready(code_forward(code_param, x))

    assert out_kernel.shape == (NUM_CODES, CODE_DIM), out_kernel.shape
    assert out_kernel.dtype == jnp.float32, out_kernel.dtype
    assert bool(jnp.all(out_kernel == code_param)), "kernel output mismatch"
    assert bool(jnp.all(out_fast == code_param)), "fast-path output mismatch"

    print("KERNEL_OK")
</pallas_src>

<mosaic_0001>
module attributes {stable_mosaic.version = 11 : i64} {
  func.func @_code_forward_kernel(%arg0: memref<23x460xf32, #tpu.memory_space<vmem>>, %arg1: memref<23x460xf32, #tpu.memory_space<vmem>>) attributes {dimension_semantics = [], scalar_prefetch = 0 : i64, scratch_operands = 0 : i64, tpu.core_type = #tpu.core_type<tc>} {
    %c0 = arith.constant 0 : index
    %c0_0 = arith.constant 0 : index
    %0 = vector.load %arg0[%c0, %c0_0] : memref<23x460xf32, #tpu.memory_space<vmem>>, vector<23x460xf32>
    %c0_1 = arith.constant 0 : index
    %c0_2 = arith.constant 0 : index
    %1 = vector.load %arg1[%c0_1, %c0_2] : memref<23x460xf32, #tpu.memory_space<vmem>>, vector<23x460xf32>
    tpu.vector_store %arg1[%c0_1, %c0_2], %0 {strides = array<i32>} : memref<23x460xf32, #tpu.memory_space<vmem>>, vector<23x460xf32>,
    return
  }
}

</mosaic_0001>

<llo_original>
// kernel: tpu_custom_call.1
$region0: #{tpu_custom_call.1}
  #allocation0 [shape = 'u32[]', space=smem, size = 0x4, offset = 0x4, fixed_abs, tag = 'smem constant byte address 0x4 - core index']
  #allocation1 [shape = 'u32[144,128]{1,0:T(1,128)}', space=vmem, size = 0x12000, scoped, tag = 'internal scratch']
  %s0 = inlined_call_operand.hbm [shape: f32[23,460], index: 0, kind: input, shape index: {}]
  %s1 = inlined_call_operand.hbm [shape: f32[23,460], index: 1, kind: output, shape index: {}]
  %s2 = sld [smem:[#allocation0]]
  $region18: #{tpu_custom_call.1} parent=0
    _
  %s4 = ssub.s32 1, %s2
  %s5 = scalar_select 0, %s4, %s2
  $region1: #{tpu_custom_call.1} parent=0
    #allocation2 [shape = 'u8[49152]{0}', space=vmem, size = 0xc000, scoped, tag = 'input window, operand 0, single buffered']
    #allocation3 [shape = 's32[1]{0}', space=sflag, size = 0x4, scoped, tag = 'scoped memory for tpu_custom_call.1']
    #allocation4 [shape = 's32[1]{0}', space=sflag, size = 0x4, scoped, tag = 'scoped memory for tpu_custom_call.1']
    #allocation5 [shape = 'u8[49152]{0}', space=vmem, size = 0xc000, scoped, tag = 'output window, operand 0, single buffered']
    %6 = vsyncpa [#allocation3], 0
    %7 = vsyncpa [#allocation4], 0
    // Predicated region
    $region2: #{tpu_custom_call.1} parent=1 // pred_check
      _
    $region3: #{tpu_custom_call.1} parent=1 // pred_check_branch
      %9 = sbr.rel (0) target = $region5
    $region4: #{tpu_custom_call.1} parent=1 // pred_region
      %s11 = ssub.s32 1536, 1536
      %12 = vsyncadd [#allocation3], %s11
      %s13 = sshll.u32 [#allocation2], 4
      %s14 = int_to_ptr.vmem [resolvable:$true] %s13
      %19 = dma.hbm_to_vmem [thread:$0]  %s0, 1536, %s14, [#allocation3], 512, 512, 32
    $region5: #{tpu_custom_call.1} parent=1 // pred_fallthru
      _
    // Predicated region
    $region6: #{tpu_custom_call.1} parent=1 // pred_check
      _
    $region7: #{tpu_custom_call.1} parent=1 // pred_check_branch
      %21 = sbr.rel (0) target = $region9
    $region8: #{tpu_custom_call.1} parent=1 // pred_region
      %22 = dma.done [#allocation3], 1536
    $region9: #{tpu_custom_call.1} parent=1 // pred_fallthru
      _
    %v23 = vld [vmem:[#allocation2] sm:$0xff]
    %v24 = vld [vmem:[#allocation2 + $0x8] sm:$0xff]
    %v25 = vld [vmem:[#allocation2 + $0x10] sm:$0xff]
    %v26 = vld [vmem:[#allocation2 + $0x18] sm:$0xff]
    %v27 = vld [vmem:[#allocation2 + $0x20] sm:$0xff]
    %v28 = vld [vmem:[#allocation2 + $0x28] sm:$0xff]
    %v29 = vld [vmem:[#allocation2 + $0x30] sm:$0xff]
    %v30 = vld [vmem:[#allocation2 + $0x38] sm:$0xff]
    %v31 = vld [vmem:[#allocation2 + $0x40] sm:$0x7f]
    %v32 = vld [vmem:[#allocation2 + $0x48] sm:$0x7f]
    %v33 = vld [vmem:[#allocation2 + $0x50] sm:$0x7f]
    %v34 = vld [vmem:[#allocation2 + $0x58] sm:$0x7f]
    %35 = vst [vmem:[#allocation5] sm:$0xff] %v23
    %36 = vst [vmem:[#allocation5 + $0x8] sm:$0xff] %v24
    %37 = vst [vmem:[#allocation5 + $0x10] sm:$0xff] %v25
    %vm38 = vcmask 621568
    %39 = vst.msk [vmem:[#allocation5 + $0x18] sm:$0xff] %vm38, %v26
    %40 = vst [vmem:[#allocation5 + $0x20] sm:$0xff] %v27
    %41 = vst [vmem:[#allocation5 + $0x28] sm:$0xff] %v28
    %42 = vst [vmem:[#allocation5 + $0x30] sm:$0xff] %v29
    %43 = vst.msk [vmem:[#allocation5 + $0x38] sm:$0xff] %vm38, %v30
    %44 = vst [vmem:[#allocation5 + $0x40] sm:$0x7f] %v31
    %45 = vst [vmem:[#allocation5 + $0x48] sm:$0x7f] %v32
    %46 = vst [vmem:[#allocation5 + $0x50] sm:$0x7f] %v33
    %vm47 = vcmask 620544
    %48 = vst.msk [vmem:[#allocation5 + $0x58] sm:$0x7f] %vm47, %v34
    // Predicated region
    $region10: #{tpu_custom_call.1} parent=1 // pred_check
      _
    $region11: #{tpu_custom_call.1} parent=1 // pred_check_branch
      %50 = sbr.rel (0) target = $region13
    $region12: #{tpu_custom_call.1} parent=1 // pred_region
      %s52 = ssub.s32 1536, 1536
      %53 = vsyncadd [#allocation4], %s52
      %s54 = sshll.u32 [#allocation5], 4
      %s55 = int_to_ptr.vmem [resolvable:$true] %s54
      %60 = dma.vmem_to_hbm [thread:$0]  %s55, 1536, %s1, [#allocation4], 512, 512, 32
    $region13: #{tpu_custom_call.1} parent=1 // pred_fallthru
      _
    // Predicated region
    $region14: #{tpu_custom_call.1} parent=1 // pred_check
      _
    $region15: #{tpu_custom_call.1} parent=1 // pred_check_branch
      %62 = sbr.rel (0) target = $region17
    $region16: #{tpu_custom_call.1} parent=1 // pred_region
      %63 = dma.done [#allocation4], 1536
    $region17: #{tpu_custom_call.1} parent=1 // pred_fallthru
      _
    %64 = vsyncpa [#allocation3], 1
    %65 = vsyncpa [#allocation4], 1

</llo_original>
